<compile_context>
chip_gen: v6e
topology: v6e:2x2x1
jax: 0.10.0
libtpu: 0.0.40
codegen_flags: <defaults>
</compile_context>

<pallas_src>
import math
import functools

import jax
import jax.numpy as jnp
from jax.experimental import pallas as pl
from jax.experimental.pallas import tpu as pltpu


# --------------------------- PE table (setup/glue) ---------------------------


def make_pe_table(d_model: int, max_len: int = 5000) -> jnp.ndarray:
    """Sinusoidal positional-encoding table, shape (max_len, d_model), f32."""
    position = jnp.arange(0, max_len, dtype=jnp.float32)[:, None]           # (L, 1)
    div_term = jnp.exp(jnp.arange(0, d_model, 2, dtype=jnp.float32)
                       * -(math.log(10000.0) / d_model))                    # (D/2,)
    pe = jnp.zeros((max_len, d_model), dtype=jnp.float32)
    pe = pe.at[:, 0::2].set(jnp.sin(position * div_term))
    pe = pe.at[:, 1::2].set(jnp.cos(position * div_term))
    return pe


# ------------------------------ Pallas kernels -------------------------------


def _pe_add_kernel(x_ref, pe_ref, o_ref):
    # Eval-mode forward: x + pe (dropout is identity).  pe broadcasts over batch.
    o_ref[...] = x_ref[...] + pe_ref[...]


def _pe_add_dropout_kernel(x_ref, pe_ref, bits_ref, o_ref, *,
                           threshold: int, scale: float):
    # Train-mode forward: dropout(x + pe), inverted scaling 1/(1-p).
    # keep  <=>  bits >= round(p * 2^32)   (P[keep] = 1 - p)
    y = x_ref[...] + pe_ref[...]
    keep = bits_ref[...] >= jnp.uint32(threshold)
    o_ref[...] = jnp.where(keep, y * scale, jnp.zeros_like(y))


# ------------------------------ tiling helpers --------------------------------


def _lane_layout(L: int):
    """Factor the flattened per-batch length L = S*D into (rows, lanes)."""
    if L % 128 == 0:
        return L // 128, 128          # lane-dense: every vreg lane row is full
    # TODO(synk): pad/repack when S*D is not a multiple of 128; fall back to a
    # single full-width block (still correct, lanes equal the full dim).
    return 1, L


def _row_tile(R: int, B: int, C: int, itemsize: int,
              target_bytes: int = 1 << 20) -> int:
    """Pick a row-tile so one x block is ~1 MiB (bounded VMEM, many pipeline steps)."""
    if R <= 8:
        return R
    tr = max(8, (target_bytes // max(1, B * C * itemsize)) // 8 * 8)
    return R if tr >= R else tr


# --------------------------------- wrapper ------------------------------------


def positional_encoding(x: jnp.ndarray,
                        pe_table: jnp.ndarray,
                        dropout_p: float = 0.1,
                        train: bool = False,
                        rng_key=None) -> jnp.ndarray:
    """x: (B, S, D).  pe_table: (max_len, D).  Returns (B, S, D)."""
    B, S, D = x.shape
    L = S * D
    R, C = _lane_layout(L)
    TR = _row_tile(R, B, C, jnp.dtype(x.dtype).itemsize)
    grid = (pl.cdiv(R, TR),)

    # Lane-dense 3D views; pe cast to x.dtype once (no in-kernel convert).
    x3 = x.reshape(B, R, C)
    pe3 = pe_table[:S, :].astype(x.dtype).reshape(1, R, C)

    x_spec = pl.BlockSpec((B, TR, C), lambda r: (0, r, 0))
    pe_spec = pl.BlockSpec((1, TR, C), lambda r: (0, r, 0))
    out_spec = pl.BlockSpec((B, TR, C), lambda r: (0, r, 0))
    params = pltpu.CompilerParams(dimension_semantics=("parallel",))
    out_shape = jax.ShapeDtypeStruct((B, R, C), x.dtype)

    if (not train) or dropout_p == 0.0:
        out = pl.pallas_call(
            _pe_add_kernel,
            out_shape=out_shape,
            grid=grid,
            in_specs=[x_spec, pe_spec],
            out_specs=out_spec,
            compiler_params=params,
        )(x3, pe3)
        return out.reshape(B, S, D)

    if rng_key is None:
        rng_key = jax.random.PRNGKey(0)
    bits = jax.random.bits(rng_key, (B, R, C), dtype=jnp.uint32)
    threshold = min(int(round(float(dropout_p) * 4294967296.0)), 4294967295)
    scale = 1.0 / (1.0 - float(dropout_p))
    kernel = functools.partial(_pe_add_dropout_kernel,
                               threshold=threshold, scale=scale)
    bits_spec = pl.BlockSpec((B, TR, C), lambda r: (0, r, 0))

    out = pl.pallas_call(
        kernel,
        out_shape=out_shape,
        grid=grid,
        in_specs=[x_spec, pe_spec, bits_spec],
        out_specs=out_spec,
        compiler_params=params,
    )(x3, pe3, bits)
    return out.reshape(B, S, D)


# ----------------------------------- main --------------------------------------


if __name__ == "__main__":
    B, S, D = 2, 8, 32          # batch=2, seq=8, d_model=32
    dropout_p = 0.1
    max_len = 64                # synthetic max_len >= S

    key = jax.random.PRNGKey(0)
    x = jax.random.normal(key, (B, S, D), dtype=jnp.float32)
    pe_table = make_pe_table(D, max_len)

    # Eval-mode forward (dropout is identity), matching module.eval().
    out = positional_encoding(x, pe_table, dropout_p=dropout_p, train=False)
    out = jax.block_until_ready(out)

    ref = x + pe_table[None, :S, :]
    assert out.shape == (B, S, D)
    assert jnp.allclose(out, ref, atol=1e-6), "eval-mode mismatch vs reference"

    # Train-mode forward (dropout with inverted scaling).
    out_train = positional_encoding(x, pe_table, dropout_p=dropout_p,
                                    train=True, rng_key=jax.random.PRNGKey(123))
    out_train = jax.block_until_ready(out_train)
    assert out_train.shape == (B, S, D)
    scale = 1.0 / (1.0 - dropout_p)
    ok = jnp.all(jnp.isclose(out_train, 0.0, atol=1e-6)
                 | jnp.isclose(out_train, ref * scale, atol=1e-5))
    assert bool(ok), "train-mode values must be 0 or (x+pe)/(1-p)"

    print("KERNEL_OK")
</pallas_src>

<mosaic_0001>
module attributes {stable_mosaic.version = 11 : i64} {
  func.func @_pe_add_kernel(%arg0: i32, %arg1: memref<2x2x128xf32, #tpu.memory_space<vmem>>, %arg2: memref<1x2x128xf32, #tpu.memory_space<vmem>>, %arg3: memref<2x2x128xf32, #tpu.memory_space<vmem>>) attributes {dimension_semantics = [#tpu.dimension_semantics<parallel>], iteration_bounds = array<i64: 1>, scalar_prefetch = 0 : i64, scratch_operands = 0 : i64, tpu.core_type = #tpu.core_type<tc>, window_params = [{transform_indices = @transform_0, window_bounds = array<i64: 2, 2, 128>}, {transform_indices = @transform_1, window_bounds = array<i64: 1, 2, 128>}, {transform_indices = @transform_2, window_bounds = array<i64: 2, 2, 128>}]} {
    %c0 = arith.constant 0 : index
    %c0_0 = arith.constant 0 : index
    %c0_1 = arith.constant 0 : index
    %0 = vector.load %arg1[%c0, %c0_0, %c0_1] : memref<2x2x128xf32, #tpu.memory_space<vmem>>, vector<2x2x128xf32>
    %c0_2 = arith.constant 0 : index
    %c0_3 = arith.constant 0 : index
    %c0_4 = arith.constant 0 : index
    %1 = vector.load %arg2[%c0_2, %c0_3, %c0_4] : memref<1x2x128xf32, #tpu.memory_space<vmem>>, vector<1x2x128xf32>
    %2 = vector.broadcast %1 : vector<1x2x128xf32> to vector<2x2x128xf32>
    %3 = arith.addf %0, %2 : vector<2x2x128xf32>
    %c0_5 = arith.constant 0 : index
    %c0_6 = arith.constant 0 : index
    %c0_7 = arith.constant 0 : index
    %4 = vector.load %arg3[%c0_5, %c0_6, %c0_7] : memref<2x2x128xf32, #tpu.memory_space<vmem>>, vector<2x2x128xf32>
    tpu.vector_store %arg3[%c0_5, %c0_6, %c0_7], %3 {strides = array<i32>} : memref<2x2x128xf32, #tpu.memory_space<vmem>>, vector<2x2x128xf32>,
    return
  }
  func.func @transform_0(%arg0: i32) -> (i32, i32, i32) {
    %c0_i32 = arith.constant 0 : i32
    %c0_i32_0 = arith.constant 0 : i32
    %c0_i32_1 = arith.constant 0 : i32
    return %c0_i32, %arg0, %c0_i32_0 : i32, i32, i32
  }
  func.func @transform_1(%arg0: i32) -> (i32, i32, i32) {
    %c0_i32 = arith.constant 0 : i32
    %c0_i32_0 = arith.constant 0 : i32
    %c0_i32_1 = arith.constant 0 : i32
    return %c0_i32, %arg0, %c0_i32_0 : i32, i32, i32
  }
  func.func @transform_2(%arg0: i32) -> (i32, i32, i32) {
    %c0_i32 = arith.constant 0 : i32
    %c0_i32_0 = arith.constant 0 : i32
    %c0_i32_1 = arith.constant 0 : i32
    return %c0_i32, %arg0, %c0_i32_0 : i32, i32, i32
  }
}

</mosaic_0001>

<llo_original>
// kernel: tpu_custom_call.1
$region0: #{tpu_custom_call.1}
  #allocation0 [shape = 'u32[]', space=smem, size = 0x4, offset = 0x4, fixed_abs, tag = 'smem constant byte address 0x4 - core index']
  #allocation1 [shape = 'u32[144,128]{1,0:T(1,128)}', space=vmem, size = 0x12000, scoped, tag = 'internal scratch']
  %s0 = inlined_call_operand.hbm [shape: f32[2,2,128], index: 0, kind: input, shape index: {}]
  %s1 = inlined_call_operand.hbm [shape: f32[1,2,128], index: 1, kind: input, shape index: {}]
  %s2 = inlined_call_operand.hbm [shape: f32[2,2,128], index: 2, kind: output, shape index: {}]
  %s3 = sld [smem:[#allocation0]]
  $region26: #{tpu_custom_call.1} parent=0
    _
  %s5 = ssub.s32 1, %s3
  %s6 = scalar_select 0, %s5, %s3
  $region1: #{tpu_custom_call.1} parent=0
    #allocation2 [shape = 'u8[2048]{0}', space=vmem, size = 0x800, scoped, tag = 'input window, operand 0, single buffered']
    #allocation3 [shape = 's32[1]{0}', space=sflag, size = 0x4, scoped, tag = 'scoped memory for tpu_custom_call.1']
    #allocation4 [shape = 's32[1]{0}', space=sflag, size = 0x4, scoped, tag = 'scoped memory for tpu_custom_call.1']
    #allocation5 [shape = 'u8[1024]{0}', space=vmem, size = 0x400, scoped, tag = 'input window, operand 1, single buffered']
    #allocation6 [shape = 's32[1]{0}', space=sflag, size = 0x4, scoped, tag = 'scoped memory for tpu_custom_call.1']
    #allocation7 [shape = 'u8[2048]{0}', space=vmem, size = 0x800, scoped, tag = 'output window, operand 0, single buffered']
    %7 = vsyncpa [#allocation3], 0
    %8 = vsyncpa [#allocation6], 0
    %9 = vsyncpa [#allocation4], 0
    // Predicated region
    $region2: #{tpu_custom_call.1} parent=1 // pred_check
      _
    $region3: #{tpu_custom_call.1} parent=1 // pred_check_branch
      %11 = sbr.rel (0) target = $region5
    $region4: #{tpu_custom_call.1} parent=1 // pred_region
      %s13 = ssub.s32 64, 64
      %14 = vsyncadd [#allocation3], %s13
      %s15 = sshll.u32 [#allocation2], 4
      %s16 = int_to_ptr.vmem [resolvable:$true] %s15
      %21 = dma.hbm_to_vmem [thread:$0]  %s0, 64, %s16, [#allocation3], 32, 32, 2
    $region5: #{tpu_custom_call.1} parent=1 // pred_fallthru
      _
    // Predicated region
    $region6: #{tpu_custom_call.1} parent=1 // pred_check
      _
    $region7: #{tpu_custom_call.1} parent=1 // pred_check_branch
      %23 = sbr.rel (0) target = $region9
    $region8: #{tpu_custom_call.1} parent=1 // pred_region
      %s25 = ssub.s32 32, 32
      %26 = vsyncadd [#allocation6], %s25
      %s28 = sshll.u32 [#allocation5], 4
      %s29 = int_to_ptr.vmem [resolvable:$true] %s28
      %31 = dma.hbm_to_vmem [thread:$0]  %s1, 32, %s29, [#allocation6]
    $region9: #{tpu_custom_call.1} parent=1 // pred_fallthru
      _
    // Predicated region
    $region10: #{tpu_custom_call.1} parent=1 // pred_check
      _
    $region11: #{tpu_custom_call.1} parent=1 // pred_check_branch
      %33 = sbr.rel (0) target = $region13
    $region12: #{tpu_custom_call.1} parent=1 // pred_region
      %34 = dma.done [#allocation3], 64
    $region13: #{tpu_custom_call.1} parent=1 // pred_fallthru
      _
    // Predicated region
    $region14: #{tpu_custom_call.1} parent=1 // pred_check
      _
    $region15: #{tpu_custom_call.1} parent=1 // pred_check_branch
      %36 = sbr.rel (0) target = $region17
    $region16: #{tpu_custom_call.1} parent=1 // pred_region
      %37 = dma.done [#allocation6], 32
    $region17: #{tpu_custom_call.1} parent=1 // pred_fallthru
      _
    %v38 = vld [vmem:[#allocation2] sm:$0x3]
    %v39 = vld [vmem:[#allocation2 + $0x2] sm:$0x3]
    %v40 = vld [vmem:[#allocation5] sm:$0x3]
    %v41 = vadd.f32 %v38, %v40
    %v42 = vadd.f32 %v39, %v40
    %43 = vst [vmem:[#allocation7] sm:$0x3] %v41
    %44 = vst [vmem:[#allocation7 + $0x2] sm:$0x3] %v42
    // Predicated region
    $region18: #{tpu_custom_call.1} parent=1 // pred_check
      _
    $region19: #{tpu_custom_call.1} parent=1 // pred_check_branch
      %46 = sbr.rel (0) target = $region21
    $region20: #{tpu_custom_call.1} parent=1 // pred_region
      %s48 = ssub.s32 64, 64
      %49 = vsyncadd [#allocation4], %s48
      %s50 = sshll.u32 [#allocation7], 4
      %s51 = int_to_ptr.vmem [resolvable:$true] %s50
      %56 = dma.vmem_to_hbm [thread:$0]  %s51, 64, %s2, [#allocation4], 32, 32, 2
    $region21: #{tpu_custom_call.1} parent=1 // pred_fallthru
      _
    // Predicated region
    $region22: #{tpu_custom_call.1} parent=1 // pred_check
      _
    $region23: #{tpu_custom_call.1} parent=1 // pred_check_branch
      %58 = sbr.rel (0) target = $region25
    $region24: #{tpu_custom_call.1} parent=1 // pred_region
      %59 = dma.done [#allocation4], 64
    $region25: #{tpu_custom_call.1} parent=1 // pred_fallthru
      _
    %60 = vsyncpa [#allocation3], 1
    %61 = vsyncpa [#allocation6], 1
    %62 = vsyncpa [#allocation4], 1

</llo_original>
